<compile_context>
chip_gen: v7x
topology: tpu7x:2x2x1
jax: 0.10.0
libtpu: 0.0.40
codegen_flags: <defaults>
</compile_context>

<pallas_src>
import jax
import jax.numpy as jnp
from jax.experimental import pallas as pl
from jax.experimental.pallas import tpu as pltpu


def _round_up(n, m):
    return ((n + m - 1) // m) * m


def linearnet_kernel(xT_ref, w_ref, b_ref, oT_ref):
    """One lane-dense batch tile through the collapsed affine map.

    xT_ref : (8, tile)  f32   batch on lanes
    w_ref  : (8, 8)     f32   W_eff^T  (out_features, in_features)
    b_ref  : (8, 1)     f32   b_eff^T  broadcast over lanes
    oT_ref : (8, tile)  f32
    """
    h = jnp.dot(w_ref[...], xT_ref[...], preferred_element_type=jnp.float32)
    oT_ref[...] = (h + b_ref[...]).astype(oT_ref.dtype)


def linearnet_forward(x, params, *, tile_b=32768):
    """x: (batch, 8) float32.  params: w{i}: (in,out) f32, b{i}: (1,out) f32."""
    batch, in_dim = x.shape
    out_dim = params["w4"].shape[1]

    # ---- collapse the four bias-carrying linear layers into one affine map ----
    w_eff = params["w1"] @ params["w2"] @ params["w3"] @ params["w4"]          # (8, 8)  (in, out)
    b_eff = ((params["b1"] @ params["w2"] + params["b2"]) @ params["w3"]
             + params["b3"]) @ params["w4"] + params["b4"]                     # (1, 8)

    w_k = w_eff.T                      # (out, in) = (8, 8)
    b_k = b_eff.T                      # (out, 1)  = (8, 1)

    # ---- lane-dense layout: batch on the 128-lane axis ----
    padded = _round_up(batch, 128)     # pad only to layout granularity
    x_t = x.T                          # (8, batch)
    if padded != batch:
        x_t = jnp.pad(x_t, ((0, 0), (0, padded - batch)))

    tile = min(tile_b, padded)
    if tile == padded and padded >= 2 * 128:
        # Give v7x's two TensorCores >= 2 grid steps to shard (no-op on v5e/v6e).
        tile = _round_up(padded // 2, 128)
    grid = (pl.cdiv(padded, tile),)    # ragged last block handled by Pallas

    out_t = pl.pallas_call(
        linearnet_kernel,
        out_shape=jax.ShapeDtypeStruct((out_dim, padded), jnp.float32),
        grid=grid,
        in_specs=[
            # x^T streamed over the batch (lane) axis.
            pl.BlockSpec((in_dim, tile), lambda i: (0, i)),
            # Weights / bias: whole-array blocks, constant index map ->
            # DMA'd once and resident in VMEM across the whole batch loop.
            pl.BlockSpec((out_dim, in_dim), lambda i: (0, 0)),
            pl.BlockSpec((out_dim, 1), lambda i: (0, 0)),
        ],
        out_specs=pl.BlockSpec((out_dim, tile), lambda i: (0, i)),
        compiler_params=pltpu.CompilerParams(
            dimension_semantics=("parallel",),
        ),
    )(x_t, w_k, b_k)

    return out_t[:, :batch].T          # back to (batch, 8)


def init_params(key):
    """Deterministic init mimicking torch.nn.Linear default (uniform +-1/sqrt(fan_in)).

    Weights stored as (in_features, out_features) = torch weight transposed.
    Biases stored as (1, out_features).
    """
    dims = [(8, 16), (16, 32), (32, 16), (16, 8)]
    params = {}
    for i, (fan_in, fan_out) in enumerate(dims, start=1):
        key, kw, kb = jax.random.split(key, 3)
        bound = 1.0 / (fan_in ** 0.5)
        params[f"w{i}"] = jax.random.uniform(
            kw, (fan_in, fan_out), jnp.float32, minval=-bound, maxval=bound)
        params[f"b{i}"] = jax.random.uniform(
            kb, (1, fan_out), jnp.float32, minval=-bound, maxval=bound)
    return params


def reference_forward(x, params):
    """Layer-by-layer f32 reference, exactly mirroring LinearNet.forward."""
    h = x @ params["w1"] + params["b1"]
    h = h @ params["w2"] + params["b2"]
    h = h @ params["w3"] + params["b3"]
    h = h @ params["w4"] + params["b4"]
    return h


if __name__ == "__main__":
    key = jax.random.PRNGKey(0)
    key, kx = jax.random.split(key)

    batch = 12  # deliberately not a multiple of 128: exercises the padding path
    x = jax.random.normal(kx, (batch, 8), jnp.float32)
    params = init_params(key)

    out = jax.block_until_ready(linearnet_forward(x, params))
    ref = reference_forward(x, params)

    assert out.shape == (batch, 8), out.shape
    # All-f32 path (composed weights differ from the chained reference only by
    # f32 rounding / matmul associativity).
    assert jnp.allclose(out, ref, atol=1e-4, rtol=1e-4), float(
        jnp.max(jnp.abs(out - ref)))

    print("KERNEL_OK")
</pallas_src>

<mosaic_0001>
module attributes {stable_mosaic.version = 11 : i64} {
  func.func @linearnet_kernel(%arg0: i32, %arg1: memref<8x128xf32, #tpu.memory_space<vmem>>, %arg2: memref<8x8xf32, #tpu.memory_space<vmem>>, %arg3: memref<8x1xf32, #tpu.memory_space<vmem>>, %arg4: memref<8x128xf32, #tpu.memory_space<vmem>>) attributes {dimension_semantics = [#tpu.dimension_semantics<parallel>], iteration_bounds = array<i64: 1>, scalar_prefetch = 0 : i64, scratch_operands = 0 : i64, tpu.core_type = #tpu.core_type<tc>, window_params = [{transform_indices = @transform_0, window_bounds = array<i64: 8, 128>}, {pipeline_mode = #tpu.pipeline_mode<synchronous>, transform_indices = @transform_1, window_bounds = array<i64: 8, 8>}, {pipeline_mode = #tpu.pipeline_mode<synchronous>, transform_indices = @transform_2, window_bounds = array<i64: 8, 1>}, {transform_indices = @transform_3, window_bounds = array<i64: 8, 128>}]} {
    %c0 = arith.constant 0 : index
    %c0_0 = arith.constant 0 : index
    %0 = vector.load %arg2[%c0, %c0_0] : memref<8x8xf32, #tpu.memory_space<vmem>>, vector<8x8xf32>
    %c0_1 = arith.constant 0 : index
    %c0_2 = arith.constant 0 : index
    %1 = vector.load %arg1[%c0_1, %c0_2] : memref<8x128xf32, #tpu.memory_space<vmem>>, vector<8x128xf32>
    %cst = arith.constant dense<0.000000e+00> : vector<8x128xf32>
    %2 = tpu.matmul %0, %1, %cst {dimension_numbers = #tpu.dot_dimension_numbers<[1], [0], [0], [1], [0, 0, 1, 1], [], []>} : vector<8x8xf32>, vector<8x128xf32>, vector<8x128xf32> -> vector<8x128xf32>
    %c0_3 = arith.constant 0 : index
    %c0_4 = arith.constant 0 : index
    %3 = vector.load %arg3[%c0_3, %c0_4] : memref<8x1xf32, #tpu.memory_space<vmem>>, vector<8x1xf32>
    %4 = vector.broadcast %3 : vector<8x1xf32> to vector<8x128xf32>
    %5 = arith.addf %2, %4 : vector<8x128xf32>
    %c0_5 = arith.constant 0 : index
    %c0_6 = arith.constant 0 : index
    %6 = vector.load %arg4[%c0_5, %c0_6] : memref<8x128xf32, #tpu.memory_space<vmem>>, vector<8x128xf32>
    tpu.vector_store %arg4[%c0_5, %c0_6], %5 {strides = array<i32>} : memref<8x128xf32, #tpu.memory_space<vmem>>, vector<8x128xf32>,
    return
  }
  func.func @transform_0(%arg0: i32) -> (i32, i32) {
    %c0_i32 = arith.constant 0 : i32
    %c0_i32_0 = arith.constant 0 : i32
    return %c0_i32, %arg0 : i32, i32
  }
  func.func @transform_1(%arg0: i32) -> (i32, i32) {
    %c0_i32 = arith.constant 0 : i32
    %c0_i32_0 = arith.constant 0 : i32
    %c0_i32_1 = arith.constant 0 : i32
    return %c0_i32, %c0_i32_0 : i32, i32
  }
  func.func @transform_2(%arg0: i32) -> (i32, i32) {
    %c0_i32 = arith.constant 0 : i32
    %c0_i32_0 = arith.constant 0 : i32
    %c0_i32_1 = arith.constant 0 : i32
    return %c0_i32, %c0_i32_0 : i32, i32
  }
  func.func @transform_3(%arg0: i32) -> (i32, i32) {
    %c0_i32 = arith.constant 0 : i32
    %c0_i32_0 = arith.constant 0 : i32
    return %c0_i32, %arg0 : i32, i32
  }
}

</mosaic_0001>

<llo_original>
// kernel: tpu_custom_call.1
$region0: #{tpu_custom_call.1}
  #allocation0 [shape = 'u32[]', space=smem, size = 0x4, offset = 0x4, fixed_abs, tag = 'smem constant byte address 0x4 - core index']
  #allocation1 [shape = 'u32[144,128]{1,0:T(1,128)}', space=vmem, size = 0x12000, scoped, tag = 'internal scratch']
  %s0 = inlined_call_operand.vmem [shape: f32[8,128], index: 0, kind: input, shape index: {}]
  %s1 = inlined_call_operand.hbm [shape: f32[8,8], index: 1, kind: input, shape index: {}]
  %s2 = inlined_call_operand.vmem [shape: f32[8,1], index: 2, kind: input, shape index: {}]
  %s3 = inlined_call_operand.hbm [shape: f32[8,128], index: 3, kind: output, shape index: {}]
  %s4 = sld [smem:[#allocation0]]
  $region26: #{tpu_custom_call.1} parent=0
    _
  %s6 = ssub.s32 1, %s4
  %s7 = scalar_select 0, %s6, %s4
  $region1: #{tpu_custom_call.1} parent=0
    #allocation2 [shape = 'u8[4096]{0}', space=vmem, size = 0x1000, scoped, tag = 'input window, operand 1, single buffered']
    #allocation3 [shape = 's32[1]{0}', space=sflag, size = 0x4, scoped, tag = 'scoped memory for tpu_custom_call.1']
    #allocation4 [shape = 's32[1]{0}', space=sflag, size = 0x4, scoped, tag = 'scoped memory for tpu_custom_call.1']
    #allocation5 [shape = 'u8[4096]{0}', space=vmem, size = 0x1000, scoped, tag = 'output window, operand 0, single buffered']
    %8 = vsyncpa [#allocation3], 0
    %9 = vsyncpa [#allocation4], 0
    // Predicated region
    $region2: #{tpu_custom_call.1} parent=1 // pred_check
      _
    $region3: #{tpu_custom_call.1} parent=1 // pred_check_branch
      %11 = sbr.rel (0) target = $region5
    $region4: #{tpu_custom_call.1} parent=1 // pred_region
      _
    $region5: #{tpu_custom_call.1} parent=1 // pred_fallthru
      _
    // Predicated region
    $region6: #{tpu_custom_call.1} parent=1 // pred_check
      _
    $region7: #{tpu_custom_call.1} parent=1 // pred_check_branch
      %13 = sbr.rel (0) target = $region9
    $region8: #{tpu_custom_call.1} parent=1 // pred_region
      %s15 = ssub.s32 128, 128
      %16 = vsyncadd [#allocation3], %s15
      %s18 = sshll.u32 [#allocation2], 4
      %s19 = int_to_ptr.vmem [resolvable:$true] %s18
      %21 = dma.hbm_to_vmem [thread:$0]  %s1, 128, %s19, [#allocation3]
    $region9: #{tpu_custom_call.1} parent=1 // pred_fallthru
      _
    // Predicated region
    $region10: #{tpu_custom_call.1} parent=1 // pred_check
      _
    $region11: #{tpu_custom_call.1} parent=1 // pred_check_branch
      %23 = sbr.rel (0) target = $region13
    $region12: #{tpu_custom_call.1} parent=1 // pred_region
      _
    $region13: #{tpu_custom_call.1} parent=1 // pred_fallthru
      _
    // Predicated region
    $region14: #{tpu_custom_call.1} parent=1 // pred_check
      _
    $region15: #{tpu_custom_call.1} parent=1 // pred_check_branch
      %25 = sbr.rel (0) target = $region17
    $region16: #{tpu_custom_call.1} parent=1 // pred_region
      %26 = dma.done [#allocation3], 128
    $region17: #{tpu_custom_call.1} parent=1 // pred_fallthru
      _
    %v27 = vld [vmem:[#allocation2] sm:$0xff]
    %v28 = vld [vmem:[%s0] sm:$0xff]
    %v29 = vld [vmem:[%s2] sm:$0xff]
    %31 = vset.pattern.permute.xlu0 0
    %32 = vperm.xlu0 %31, %v29
    %v33 = vpop.permute.xlu0 %32
    %vm35 = vcmask 64512
    %v37 = vsel %vm35, %v27, 0
    %39 = vmatprep.subr.mxu0 0.0
    %40 = vmatpush1.msra.mxu0 %v28
    %41 = vmatprep.subr.mxu0 0.0
    %42 = vmatpush1.msra.mxu0 0.0
    %43 = vmatprep.subr.mxu0 0.0
    %44 = vmatpush1.msra.mxu0 0.0
    %45 = vmatprep.subr.mxu0 0.0
    %46 = vmatpush1.msra.mxu0 0.0
    %47 = vmatprep.subr.mxu0 0.0
    %48 = vmatpush1.msra.mxu0 0.0
    %49 = vmatprep.subr.mxu0 0.0
    %50 = vmatpush1.msra.mxu0 0.0
    %51 = vmatprep.subr.mxu0 0.0
    %52 = vmatpush1.msra.mxu0 0.0
    %53 = vmatprep.subr.mxu0 0.0
    %54 = vmatpush1.msra.mxu0 0.0
    %55 = vmatprep.subr.mxu0 0.0
    %56 = vmatpush1.msra.mxu0 0.0
    %57 = vmatprep.subr.mxu0 0.0
    %58 = vmatpush1.msra.mxu0 0.0
    %59 = vmatprep.subr.mxu0 0.0
    %60 = vmatpush1.msra.mxu0 0.0
    %61 = vmatprep.subr.mxu0 0.0
    %62 = vmatpush1.msra.mxu0 0.0
    %63 = vmatprep.subr.mxu0 0.0
    %64 = vmatpush1.msra.mxu0 0.0
    %65 = vmatprep.subr.mxu0 0.0
    %66 = vmatpush1.msra.mxu0 0.0
    %67 = vmatprep.subr.mxu0 0.0
    %68 = vmatpush1.msra.mxu0 0.0
    %69 = vmatprep.subr.mxu0 0.0
    %70 = vmatpush1.msra.mxu0 0.0
    %71 = vmatprep.subr.mxu0 0.0
    %72 = vmatpush1.msra.mxu0 0.0
    %73 = vmatprep.subr.mxu0 0.0
    %74 = vmatpush1.msra.mxu0 0.0
    %75 = vmatprep.subr.mxu0 0.0
    %76 = vmatpush1.msra.mxu0 0.0
    %77 = vmatprep.subr.mxu0 0.0
    %78 = vmatpush1.msra.mxu0 0.0
    %79 = vmatprep.subr.mxu0 0.0
    %80 = vmatpush1.msra.mxu0 0.0
    %81 = vmatprep.subr.mxu0 0.0
    %82 = vmatpush1.msra.mxu0 0.0
    %83 = vmatprep.subr.mxu0 0.0
    %84 = vmatpush1.msra.mxu0 0.0
    %85 = vmatprep.subr.mxu0 0.0
    %86 = vmatpush1.msra.mxu0 0.0
    %87 = vmatprep.subr.mxu0 0.0
    %88 = vmatpush1.msra.mxu0 0.0
    %89 = vmatprep.subr.mxu0 0.0
    %90 = vmatpush1.msra.mxu0 0.0
    %91 = vmatprep.subr.mxu0 0.0
    %92 = vmatpush1.msra.mxu0 0.0
    %93 = vmatprep.subr.mxu0 0.0
    %94 = vmatpush1.msra.mxu0 0.0
    %95 = vmatprep.subr.mxu0 0.0
    %96 = vmatpush1.msra.mxu0 0.0
    %97 = vmatprep.subr.mxu0 0.0
    %98 = vmatpush1.msra.mxu0 0.0
    %99 = vmatprep.subr.mxu0 0.0
    %100 = vmatpush1.msra.mxu0 0.0
    %101 = vmatprep.subr.mxu0 0.0
    %102 = vmatpush1.msra.mxu0 0.0
    %103 = vmatprep.mubr.f32.mxu0 0.0
    %104 = vmatmul.mubr.f32.gmra.mrb[0].mxu0 %v37
    %v105 = vpop.f32.mrb[0].mxu0
    %v106 = vadd.f32 %v33, %v105
    %v107 = vpop.f32.mrb[0].mxu0
    %108 = vdwg.mxu0
    %109 = vst [vmem:[#allocation5] sm:$0xff] %v106
    // Predicated region
    $region18: #{tpu_custom_call.1} parent=1 // pred_check
      _
    $region19: #{tpu_custom_call.1} parent=1 // pred_check_branch
      %111 = sbr.rel (0) target = $region21
    $region20: #{tpu_custom_call.1} parent=1 // pred_region
      %s113 = ssub.s32 128, 128
      %114 = vsyncadd [#allocation4], %s113
      %s116 = sshll.u32 [#allocation5], 4
      %s117 = int_to_ptr.vmem [resolvable:$true] %s116
      %119 = dma.vmem_to_hbm [thread:$0]  %s117, 128, %s3, [#allocation4]
    $region21: #{tpu_custom_call.1} parent=1 // pred_fallthru
      _
    // Predicated region
    $region22: #{tpu_custom_call.1} parent=1 // pred_check
      _
    $region23: #{tpu_custom_call.1} parent=1 // pred_check_branch
      %121 = sbr.rel (0) target = $region25
    $region24: #{tpu_custom_call.1} parent=1 // pred_region
      %122 = dma.done [#allocation4], 128
    $region25: #{tpu_custom_call.1} parent=1 // pred_fallthru
      _
    %123 = vsyncpa [#allocation3], 1
    %124 = vsyncpa [#allocation4], 1

</llo_original>
